<compile_context>
chip_gen: v6e
topology: v6e:2x2x1
jax: 0.10.0
libtpu: 0.0.40
codegen_flags: <defaults>
</compile_context>

<pallas_src>
import jax
import jax.numpy as jnp
from jax.experimental import pallas as pl
from jax.experimental.pallas import tpu as pltpu


def _round_up(x, m):
    return ((x + m - 1) // m) * m


def _round_down(x, m):
    return (x // m) * m


# ---------------------------------------------------------------------------
# Kernels
# ---------------------------------------------------------------------------
def _ffn_kernel_direct(x_ref, w1_ref, b1_ref, w2_ref, b2_ref, o_ref):
    """Accumulate directly into the f32 output block (resident across k)."""
    k = pl.program_id(1)

    # First matmul + bias + ReLU on the current d_ff slice (f32 accumulation).
    h = jnp.dot(x_ref[...], w1_ref[...], preferred_element_type=jnp.float32)
    h = jnp.maximum(h + b1_ref[...].astype(jnp.float32), 0.0)
    # dropout: identity in eval mode.

    # Second matmul on this d_ff slice.
    y = jnp.dot(h.astype(w2_ref.dtype), w2_ref[...],
                preferred_element_type=jnp.float32)

    @pl.when(k == 0)
    def _():
        o_ref[...] = y                       # first slice: direct store (no zero-init pass)

    @pl.when(k > 0)
    def _():
        o_ref[...] += y                      # later slices: accumulate in place

    @pl.when(k == pl.num_programs(1) - 1)
    def _():
        o_ref[...] += b2_ref[...].astype(jnp.float32)


def _ffn_kernel_scratch(x_ref, w1_ref, b1_ref, w2_ref, b2_ref, o_ref, acc_ref):
    """f32 scratch accumulator; used when the output dtype is not f32."""
    k = pl.program_id(1)

    h = jnp.dot(x_ref[...], w1_ref[...], preferred_element_type=jnp.float32)
    h = jnp.maximum(h + b1_ref[...].astype(jnp.float32), 0.0)
    y = jnp.dot(h.astype(w2_ref.dtype), w2_ref[...],
                preferred_element_type=jnp.float32)

    @pl.when(k == 0)
    def _():
        acc_ref[...] = y

    @pl.when(k > 0)
    def _():
        acc_ref[...] += y

    @pl.when(k == pl.num_programs(1) - 1)
    def _():
        o_ref[...] = (acc_ref[...]
                      + b2_ref[...].astype(jnp.float32)).astype(o_ref.dtype)


# ---------------------------------------------------------------------------
# Hardware query (generation-aware defaults)
# ---------------------------------------------------------------------------
def _tpu_config():
    kind = ""
    try:
        kind = jax.devices()[0].device_kind.lower()
    except Exception:
        pass
    if "v7" in kind:
        num_tc, vmem_fallback, def_tm = 2, 64 << 20, 512     # 64 MiB / TC, 2 TCs
    elif "v6" in kind:
        num_tc, vmem_fallback, def_tm = 1, 128 << 20, 1024   # crossover ~640 f/B
    elif "v5e" in kind or "v5 lite" in kind or "v5lite" in kind:
        num_tc, vmem_fallback, def_tm = 1, 128 << 20, 256    # crossover ~240 f/B
    else:
        num_tc, vmem_fallback, def_tm = 1, 128 << 20, 512
    try:
        vmem_cap = int(pltpu.get_tpu_info().vmem_capacity_bytes)
    except Exception:
        vmem_cap = vmem_fallback
    return num_tc, vmem_cap, def_tm


# ---------------------------------------------------------------------------
# Wrapper
# ---------------------------------------------------------------------------
def positionwise_feed_forward(x, w1, b1, w2, b2, *,
                              tile_rows=None, tile_ff=None,
                              compute_dtype=jnp.bfloat16, vmem_frac=0.75):
    """FFN forward (eval mode).

    x:  (B, S, d_model)
    w1: (d_model, d_ff)   (transposed from torch's (d_ff, d_model))
    b1: (d_ff,)
    w2: (d_ff, d_model)
    b2: (d_model,)
    """
    B, S, d_model = x.shape
    d_ff = w1.shape[1]
    N = B * S
    out_dtype = x.dtype

    num_tc, vmem_cap, def_tm = _tpu_config()
    vmem_budget = int(vmem_cap * vmem_frac)

    # ---- compute (MXU input) dtype: bf16 by default; never upcast ----------
    cdt = jnp.dtype(x.dtype) if compute_dtype is None else jnp.dtype(compute_dtype)
    if jnp.dtype(x.dtype).itemsize <= cdt.itemsize:
        cdt = jnp.dtype(x.dtype)
    itemsize = cdt.itemsize
    sub = 8 if itemsize >= 4 else 16      # sublane packing of the compute dtype

    x2d = x.reshape(N, d_model).astype(cdt)
    w1c = w1.astype(cdt)
    w2c = w2.astype(cdt)

    # ---- row (token) tiling -------------------------------------------------
    tm = def_tm if tile_rows is None else int(tile_rows)
    tm = max(sub, min(tm, _round_up(N, sub)))
    tm = _round_up(tm, sub)
    if num_tc >= 2 and N > sub:
        # Guarantee >=2 row tiles so the "parallel" axis can shard across TCs.
        half = _round_up(-(-N // num_tc), sub)
        tm = max(sub, min(tm, half))

    # ---- d_ff (reduction) tiling: VMEM-driven -------------------------------
    if tile_ff is not None:
        tk = min(int(tile_ff), d_ff)
    elif 2 * d_model * d_ff * itemsize <= vmem_budget // 3:
        tk = d_ff                 # weights fully resident -> k grid collapses to 1
    else:
        tk = min(512, d_ff)
    if tk < d_ff:
        tk = max(128, _round_down(tk, 128))   # lane-dense W1 cols / W2 rows

    acc_bytes = 0 if out_dtype == jnp.float32 else 4

    def _footprint(tm_, tk_):
        f = 2 * tm_ * d_model * itemsize                        # x tile (dbl-buf)
        f += 2 * d_model * tk_ * itemsize                       # W1 tile
        f += 2 * tk_ * 4                                        # b1 slice
        f += 2 * tk_ * d_model * itemsize                       # W2 tile
        f += 2 * d_model * 4                                    # b2
        f += 2 * tm_ * d_model * jnp.dtype(out_dtype).itemsize  # out tile
        f += tm_ * d_model * acc_bytes                          # f32 scratch
        return f

    # Fit in the VMEM budget: shrink tk first (costs nothing to arithmetic
    # intensity -- weights are streamed anyway), but not below 256 while tm
    # can still shrink; then shrink tm.
    while _footprint(tm, tk) > vmem_budget:
        if tk > 256:
            tk = max(256, _round_down(tk // 2, 128))
        elif tm > sub:
            tm = max(sub, _round_up(tm // 2, sub))
        elif tk > 128:
            tk = max(128, _round_down(tk // 2, 128))
        else:
            break

    # ---- padding (ragged N / d_ff) ------------------------------------------
    d_ff_pad = _round_up(d_ff, tk) if tk < d_ff else d_ff
    if d_ff_pad > d_ff:
        # Padded W1 cols / b1 entries / W2 rows are zero -> contribute exactly 0.
        w1c = jnp.pad(w1c, ((0, 0), (0, d_ff_pad - d_ff)))
        b1 = jnp.pad(b1, (0, d_ff_pad - d_ff))
        w2c = jnp.pad(w2c, ((0, d_ff_pad - d_ff), (0, 0)))

    n_pad = _round_up(N, tm)
    if n_pad > N:
        x2d = jnp.pad(x2d, ((0, n_pad - N), (0, 0)))

    b1_2d = b1.reshape(1, d_ff_pad).astype(jnp.float32)
    b2_2d = b2.reshape(1, d_model).astype(jnp.float32)

    grid = (n_pad // tm, d_ff_pad // tk)     # (row tiles, d_ff reduction) - k last

    in_specs = [
        pl.BlockSpec((tm, d_model), lambda i, k: (i, 0)),   # x row tile
        pl.BlockSpec((d_model, tk), lambda i, k: (0, k)),   # W1 column tile
        pl.BlockSpec((1, tk),       lambda i, k: (0, k)),   # b1 slice
        pl.BlockSpec((tk, d_model), lambda i, k: (k, 0)),   # W2 row tile
        pl.BlockSpec((1, d_model),  lambda i, k: (0, 0)),   # b2
    ]
    out_spec = pl.BlockSpec((tm, d_model), lambda i, k: (i, 0))

    if out_dtype == jnp.float32:
        kernel = _ffn_kernel_direct          # accumulate straight into o_ref
        scratch_shapes = []
    else:
        kernel = _ffn_kernel_scratch
        scratch_shapes = [pltpu.VMEM((tm, d_model), jnp.float32)]

    out2d = pl.pallas_call(
        kernel,
        out_shape=jax.ShapeDtypeStruct((n_pad, d_model), out_dtype),
        grid_spec=pltpu.PrefetchScalarGridSpec(
            num_scalar_prefetch=0,
            grid=grid,
            in_specs=in_specs,
            out_specs=out_spec,
            scratch_shapes=scratch_shapes,
        ),
        compiler_params=pltpu.CompilerParams(
            dimension_semantics=("parallel", "arbitrary"),
            vmem_limit_bytes=int(vmem_budget),
        ),
    )(x2d, w1c, b1_2d, w2c, b2_2d)

    return out2d[:N].reshape(B, S, d_model)


# ---------------------------------------------------------------------------
# References + tests
# ---------------------------------------------------------------------------
def _reference(x, w1, b1, w2, b2):
    d_model = x.shape[-1]
    h = jnp.maximum(x.reshape(-1, d_model) @ w1 + b1, 0.0)
    y = h @ w2 + b2
    return y.reshape(x.shape[:-1] + (w2.shape[-1],))


def _reference_bf16(x, w1, b1, w2, b2):
    """Mirrors the kernel's bf16-MXU / f32-accumulate math."""
    d_model = x.shape[-1]
    xb = x.reshape(-1, d_model).astype(jnp.bfloat16)
    h = jnp.dot(xb, w1.astype(jnp.bfloat16),
                preferred_element_type=jnp.float32) + b1
    h = jnp.maximum(h, 0.0)
    y = jnp.dot(h.astype(jnp.bfloat16), w2.astype(jnp.bfloat16),
                preferred_element_type=jnp.float32) + b2
    return y.reshape(x.shape[:-1] + (w2.shape[-1],)).astype(x.dtype)


if __name__ == "__main__":
    key = jax.random.PRNGKey(0)

    # --- Test 1: small shapes, pure f32 path (bit-faithful vs reference) -----
    B, S, d_model, d_ff = 2, 8, 32, 64
    kx, kw1, kb1, kw2, kb2, k2 = jax.random.split(key, 6)

    x = jax.random.normal(kx, (B, S, d_model), dtype=jnp.float32)
    bound1 = 1.0 / (d_model ** 0.5)
    bound2 = 1.0 / (d_ff ** 0.5)
    w1 = jax.random.uniform(kw1, (d_model, d_ff), jnp.float32, -bound1, bound1)
    b1 = jax.random.uniform(kb1, (d_ff,), jnp.float32, -bound1, bound1)
    w2 = jax.random.uniform(kw2, (d_ff, d_model), jnp.float32, -bound2, bound2)
    b2 = jax.random.uniform(kb2, (d_model,), jnp.float32, -bound2, bound2)

    y_f32 = jax.block_until_ready(
        positionwise_feed_forward(x, w1, b1, w2, b2, compute_dtype=None))
    y_ref = _reference(x, w1, b1, w2, b2)
    assert jnp.allclose(y_f32, y_ref, atol=1e-5, rtol=1e-5), "f32 path mismatch"

    # --- Test 1b: default bf16-MXU path on the same inputs -------------------
    y_bf = jax.block_until_ready(positionwise_feed_forward(x, w1, b1, w2, b2))
    y_bf_ref = _reference_bf16(x, w1, b1, w2, b2)
    assert jnp.allclose(y_bf, y_bf_ref, atol=2e-3, rtol=2e-3), "bf16 path mismatch"

    # --- Test 2: ragged N + forced d_ff reduction tiling (multi-k accumulate) -
    B2, S2, dm2, dff2 = 3, 37, 128, 320     # N = 111 (ragged), d_ff padded to 384
    kx2, kw1b, kb1b, kw2b, kb2b = jax.random.split(k2, 5)
    x_b = jax.random.normal(kx2, (B2, S2, dm2), dtype=jnp.float32)
    bb1 = 1.0 / (dm2 ** 0.5)
    bb2 = 1.0 / (dff2 ** 0.5)
    w1_b = jax.random.uniform(kw1b, (dm2, dff2), jnp.float32, -bb1, bb1)
    b1_b = jax.random.uniform(kb1b, (dff2,), jnp.float32, -bb1, bb1)
    w2_b = jax.random.uniform(kw2b, (dff2, dm2), jnp.float32, -bb2, bb2)
    b2_b = jax.random.uniform(kb2b, (dm2,), jnp.float32, -bb2, bb2)

    y_b = jax.block_until_ready(
        positionwise_feed_forward(x_b, w1_b, b1_b, w2_b, b2_b, tile_ff=128))
    y_b_ref = _reference_bf16(x_b, w1_b, b1_b, w2_b, b2_b)
    assert jnp.allclose(y_b, y_b_ref, atol=3e-3, rtol=3e-3), "tiled-path mismatch"

    # --- Test 3: bf16 activations (exercises the f32-scratch output kernel) --
    x_c = x.astype(jnp.bfloat16)
    y_c = jax.block_until_ready(positionwise_feed_forward(x_c, w1, b1, w2, b2))
    y_c_ref = _reference_bf16(x_c.astype(jnp.float32), w1, b1, w2, b2)
    diff = jnp.abs(y_c.astype(jnp.float32) - y_c_ref)
    assert float(diff.max()) < 2e-2, "bf16-output path mismatch"

    print("KERNEL_OK")
</pallas_src>

<mosaic_0001>
module attributes {stable_mosaic.version = 11 : i64} {
  func.func @_ffn_kernel_direct(%arg0: i32, %arg1: i32, %arg2: memref<16x32xf32, #tpu.memory_space<vmem>>, %arg3: memref<32x64xf32, #tpu.memory_space<vmem>>, %arg4: memref<1x64xf32, #tpu.memory_space<vmem>>, %arg5: memref<64x32xf32, #tpu.memory_space<vmem>>, %arg6: memref<1x32xf32, #tpu.memory_space<vmem>>, %arg7: memref<16x32xf32, #tpu.memory_space<vmem>>) attributes {dimension_semantics = [#tpu.dimension_semantics<parallel>, #tpu.dimension_semantics<arbitrary>], iteration_bounds = array<i64: 1, 1>, scalar_prefetch = 0 : i64, scratch_operands = 0 : i64, tpu.core_type = #tpu.core_type<tc>, window_params = [{transform_indices = @transform_0, window_bounds = array<i64: 16, 32>}, {transform_indices = @transform_1, window_bounds = array<i64: 32, 64>}, {transform_indices = @transform_2, window_bounds = array<i64: 1, 64>}, {transform_indices = @transform_3, window_bounds = array<i64: 64, 32>}, {pipeline_mode = #tpu.pipeline_mode<synchronous>, transform_indices = @transform_4, window_bounds = array<i64: 1, 32>}, {transform_indices = @transform_5, window_bounds = array<i64: 16, 32>}]} {
    %c0 = arith.constant 0 : index
    %c0_0 = arith.constant 0 : index
    %0 = vector.load %arg2[%c0, %c0_0] : memref<16x32xf32, #tpu.memory_space<vmem>>, vector<16x32xf32>
    %c0_1 = arith.constant 0 : index
    %c0_2 = arith.constant 0 : index
    %1 = vector.load %arg3[%c0_1, %c0_2] : memref<32x64xf32, #tpu.memory_space<vmem>>, vector<32x64xf32>
    %cst = arith.constant dense<0.000000e+00> : vector<16x64xf32>
    %2 = tpu.matmul %0, %1, %cst {dimension_numbers = #tpu.dot_dimension_numbers<[1], [0], [0], [1], [0, 0, 1, 1], [], []>} : vector<16x32xf32>, vector<32x64xf32>, vector<16x64xf32> -> vector<16x64xf32>
    %c0_3 = arith.constant 0 : index
    %c0_4 = arith.constant 0 : index
    %3 = vector.load %arg4[%c0_3, %c0_4] : memref<1x64xf32, #tpu.memory_space<vmem>>, vector<1x64xf32>
    %4 = vector.broadcast %3 : vector<1x64xf32> to vector<16x64xf32>
    %5 = arith.addf %2, %4 : vector<16x64xf32>
    %cst_5 = arith.constant 0.000000e+00 : f32
    %6 = vector.broadcast %cst_5 : f32 to vector<16x64xf32>
    %7 = arith.maximumf %5, %6 : vector<16x64xf32>
    %c0_6 = arith.constant 0 : index
    %c0_7 = arith.constant 0 : index
    %8 = vector.load %arg5[%c0_6, %c0_7] : memref<64x32xf32, #tpu.memory_space<vmem>>, vector<64x32xf32>
    %cst_8 = arith.constant dense<0.000000e+00> : vector<16x32xf32>
    %9 = tpu.matmul %7, %8, %cst_8 {dimension_numbers = #tpu.dot_dimension_numbers<[1], [0], [0], [1], [0, 0, 1, 1], [], []>} : vector<16x64xf32>, vector<64x32xf32>, vector<16x32xf32> -> vector<16x32xf32>
    %c0_i32 = arith.constant 0 : i32
    %10 = arith.cmpi eq, %arg1, %c0_i32 : i32
    %11 = arith.extui %10 : i1 to i32
    %c0_i32_9 = arith.constant 0 : i32
    %12 = arith.cmpi ne, %11, %c0_i32_9 : i32
    scf.if %12 {
      %c0_14 = arith.constant 0 : index
      %c0_15 = arith.constant 0 : index
      %19 = vector.load %arg7[%c0_14, %c0_15] : memref<16x32xf32, #tpu.memory_space<vmem>>, vector<16x32xf32>
      tpu.vector_store %arg7[%c0_14, %c0_15], %9 {strides = array<i32>} : memref<16x32xf32, #tpu.memory_space<vmem>>, vector<16x32xf32>,
    } else {
    }
    %c0_i32_10 = arith.constant 0 : i32
    %13 = arith.cmpi sgt, %arg1, %c0_i32_10 : i32
    %14 = arith.extui %13 : i1 to i32
    %c0_i32_11 = arith.constant 0 : i32
    %15 = arith.cmpi ne, %14, %c0_i32_11 : i32
    scf.if %15 {
      %c0_14 = arith.constant 0 : index
      %c0_15 = arith.constant 0 : index
      %19 = vector.load %arg7[%c0_14, %c0_15] : memref<16x32xf32, #tpu.memory_space<vmem>>, vector<16x32xf32>
      %20 = arith.addf %19, %9 : vector<16x32xf32>
      %c0_16 = arith.constant 0 : index
      %c0_17 = arith.constant 0 : index
      %21 = vector.load %arg7[%c0_16, %c0_17] : memref<16x32xf32, #tpu.memory_space<vmem>>, vector<16x32xf32>
      tpu.vector_store %arg7[%c0_16, %c0_17], %20 {strides = array<i32>} : memref<16x32xf32, #tpu.memory_space<vmem>>, vector<16x32xf32>,
    } else {
    }
    %c0_i32_12 = arith.constant 0 : i32
    %16 = arith.cmpi eq, %arg1, %c0_i32_12 : i32
    %17 = arith.extui %16 : i1 to i32
    %c0_i32_13 = arith.constant 0 : i32
    %18 = arith.cmpi ne, %17, %c0_i32_13 : i32
    scf.if %18 {
      %c0_14 = arith.constant 0 : index
      %c0_15 = arith.constant 0 : index
      %19 = vector.load %arg7[%c0_14, %c0_15] : memref<16x32xf32, #tpu.memory_space<vmem>>, vector<16x32xf32>
      %c0_16 = arith.constant 0 : index
      %c0_17 = arith.constant 0 : index
      %20 = vector.load %arg6[%c0_16, %c0_17] : memref<1x32xf32, #tpu.memory_space<vmem>>, vector<1x32xf32>
      %21 = vector.broadcast %20 : vector<1x32xf32> to vector<16x32xf32>
      %22 = arith.addf %19, %21 : vector<16x32xf32>
      %c0_18 = arith.constant 0 : index
      %c0_19 = arith.constant 0 : index
      %23 = vector.load %arg7[%c0_18, %c0_19] : memref<16x32xf32, #tpu.memory_space<vmem>>, vector<16x32xf32>
      tpu.vector_store %arg7[%c0_18, %c0_19], %22 {strides = array<i32>} : memref<16x32xf32, #tpu.memory_space<vmem>>, vector<16x32xf32>,
    } else {
    }
    return
  }
  func.func @transform_0(%arg0: i32, %arg1: i32) -> (i32, i32) {
    %c0_i32 = arith.constant 0 : i32
    %c0_i32_0 = arith.constant 0 : i32
    return %arg0, %c0_i32 : i32, i32
  }
  func.func @transform_1(%arg0: i32, %arg1: i32) -> (i32, i32) {
    %c0_i32 = arith.constant 0 : i32
    %c0_i32_0 = arith.constant 0 : i32
    return %c0_i32, %arg1 : i32, i32
  }
  func.func @transform_2(%arg0: i32, %arg1: i32) -> (i32, i32) {
    %c0_i32 = arith.constant 0 : i32
    %c0_i32_0 = arith.constant 0 : i32
    return %c0_i32, %arg1 : i32, i32
  }
  func.func @transform_3(%arg0: i32, %arg1: i32) -> (i32, i32) {
    %c0_i32 = arith.constant 0 : i32
    %c0_i32_0 = arith.constant 0 : i32
    return %arg1, %c0_i32 : i32, i32
  }
  func.func @transform_4(%arg0: i32, %arg1: i32) -> (i32, i32) {
    %c0_i32 = arith.constant 0 : i32
    %c0_i32_0 = arith.constant 0 : i32
    %c0_i32_1 = arith.constant 0 : i32
    return %c0_i32, %c0_i32_0 : i32, i32
  }
  func.func @transform_5(%arg0: i32, %arg1: i32) -> (i32, i32) {
    %c0_i32 = arith.constant 0 : i32
    %c0_i32_0 = arith.constant 0 : i32
    return %arg0, %c0_i32 : i32, i32
  }
}

</mosaic_0001>

<llo_original>
// kernel: tpu_custom_call.1
$region0: #{tpu_custom_call.1}
  #allocation0 [shape = 'u32[]', space=smem, size = 0x4, offset = 0x4, fixed_abs, tag = 'smem constant byte address 0x4 - core index']
  #allocation1 [shape = 'u32[144,128]{1,0:T(1,128)}', space=vmem, size = 0x12000, scoped, tag = 'internal scratch']
  %s0 = inlined_call_operand.vmem [shape: f32[16,32], index: 0, kind: input, shape index: {}]
  %s1 = inlined_call_operand.vmem [shape: f32[32,64], index: 1, kind: input, shape index: {}]
  %s2 = inlined_call_operand.vmem [shape: f32[1,64], index: 2, kind: input, shape index: {}]
  %s3 = inlined_call_operand.vmem [shape: f32[64,32], index: 3, kind: input, shape index: {}]
  %s4 = inlined_call_operand.vmem [shape: f32[1,32], index: 4, kind: input, shape index: {}]
  %s5 = inlined_call_operand.hbm [shape: f32[16,32], index: 5, kind: output, shape index: {}]
  %s6 = sld [smem:[#allocation0]]
  $region42: #{tpu_custom_call.1} parent=0
    _
  %s8 = ssub.s32 1, %s6
  %s9 = scalar_select 0, %s8, %s6
  $region1: #{tpu_custom_call.1} parent=0
    #allocation2 [shape = 'u8[8192]{0}', space=vmem, size = 0x2000, scoped, tag = 'output window, operand 0, single buffered']
    #allocation3 [shape = 's32[1]{0}', space=sflag, size = 0x4, scoped, tag = 'scoped memory for tpu_custom_call.1']
    %10 = vsyncpa [#allocation3], 0
    // Predicated region
    $region2: #{tpu_custom_call.1} parent=1 // pred_check
      _
    $region3: #{tpu_custom_call.1} parent=1 // pred_check_branch
      %12 = sbr.rel (0) target = $region5
    $region4: #{tpu_custom_call.1} parent=1 // pred_region
      _
    $region5: #{tpu_custom_call.1} parent=1 // pred_fallthru
      _
    // Predicated region
    $region6: #{tpu_custom_call.1} parent=1 // pred_check
      _
    $region7: #{tpu_custom_call.1} parent=1 // pred_check_branch
      %14 = sbr.rel (0) target = $region9
    $region8: #{tpu_custom_call.1} parent=1 // pred_region
      _
    $region9: #{tpu_custom_call.1} parent=1 // pred_fallthru
      _
    // Predicated region
    $region10: #{tpu_custom_call.1} parent=1 // pred_check
      _
    $region11: #{tpu_custom_call.1} parent=1 // pred_check_branch
      %16 = sbr.rel (0) target = $region13
    $region12: #{tpu_custom_call.1} parent=1 // pred_region
      _
    $region13: #{tpu_custom_call.1} parent=1 // pred_fallthru
      _
    // Predicated region
    $region14: #{tpu_custom_call.1} parent=1 // pred_check
      _
    $region15: #{tpu_custom_call.1} parent=1 // pred_check_branch
      %18 = sbr.rel (0) target = $region17
    $region16: #{tpu_custom_call.1} parent=1 // pred_region
      _
    $region17: #{tpu_custom_call.1} parent=1 // pred_fallthru
      _
    // Predicated region
    $region18: #{tpu_custom_call.1} parent=1 // pred_check
      _
    $region19: #{tpu_custom_call.1} parent=1 // pred_check_branch
      %20 = sbr.rel (0) target = $region21
    $region20: #{tpu_custom_call.1} parent=1 // pred_region
      _
    $region21: #{tpu_custom_call.1} parent=1 // pred_fallthru
      _
    %v21 = vld [vmem:[%s0] sm:$0xff]
    %v22 = vld [vmem:[%s0 + $0x8] sm:$0xff]
    %v23 = vld [vmem:[%s1] sm:$0xff]
    %v24 = vld [vmem:[%s1 + $0x8] sm:$0xff]
    %v25 = vld [vmem:[%s1 + $0x10] sm:$0xff]
    %v26 = vld [vmem:[%s1 + $0x18] sm:$0xff]
    %v27 = vld [vmem:[%s2] sm:$0x1]
    %v29 = vlaneseq
    %v30 = vshrl.u32 %v29, 7
    %v31 = vsub.s32 0, %v30
    %v32 = vrot.slane %v27, %v31
    %vm34 = vcmask 261120
    %v36 = vsel %vm34, %v21, 0
    %v39 = vsel %vm34, %v22, 0
    %41 = vmatprep.subr.mxu0 0.0
    %42 = vmatpush1.msra.mxu0 0.0
    %43 = vmatprep.subr.mxu0 0.0
    %44 = vmatpush1.msra.mxu0 0.0
    %45 = vmatprep.subr.mxu0 0.0
    %46 = vmatpush1.msra.mxu0 0.0
    %47 = vmatprep.subr.mxu0 0.0
    %48 = vmatpush1.msra.mxu0 0.0
    %49 = vmatprep.subr.mxu0 0.0
    %50 = vmatpush1.msra.mxu0 0.0
    %51 = vmatprep.subr.mxu0 0.0
    %52 = vmatpush1.msra.mxu0 0.0
    %53 = vmatprep.subr.mxu0 0.0
    %54 = vmatpush1.msra.mxu0 0.0
    %55 = vmatprep.subr.mxu0 0.0
    %56 = vmatpush1.msra.mxu0 0.0
    %57 = vmatprep.subr.mxu0 0.0
    %58 = vmatpush1.msra.mxu0 0.0
    %59 = vmatprep.subr.mxu0 0.0
    %60 = vmatpush1.msra.mxu0 0.0
    %61 = vmatprep.subr.mxu0 0.0
    %62 = vmatpush1.msra.mxu0 0.0
    %63 = vmatprep.subr.mxu0 0.0
    %64 = vmatpush1.msra.mxu0 0.0
    %65 = vmatprep.subr.mxu0 0.0
    %66 = vmatpush1.msra.mxu0 %v26
    %67 = vmatprep.subr.mxu0 0.0
    %68 = vmatpush1.msra.mxu0 %v25
    %69 = vmatprep.subr.mxu0 0.0
    %70 = vmatpush1.msra.mxu0 %v24
    %71 = vmatprep.subr.mxu0 0.0
    %72 = vmatpush1.msra.mxu0 %v23
    %73 = vmatprep.subr.mxu0 0.0
    %74 = vmatpush2.msra.mxu0 0.0
    %75 = vmatprep.subr.mxu0 0.0
    %76 = vmatpush2.msra.mxu0 0.0
    %77 = vmatprep.subr.mxu0 0.0
    %78 = vmatpush2.msra.mxu0 0.0
    %79 = vmatprep.subr.mxu0 0.0
    %80 = vmatpush2.msra.mxu0 0.0
    %81 = vmatprep.subr.mxu0 0.0
    %82 = vmatpush2.msra.mxu0 0.0
    %83 = vmatprep.subr.mxu0 0.0
    %84 = vmatpush2.msra.mxu0 0.0
    %85 = vmatprep.subr.mxu0 0.0
    %86 = vmatpush2.msra.mxu0 0.0
    %87 = vmatprep.subr.mxu0 0.0
    %88 = vmatpush2.msra.mxu0 0.0
    %89 = vmatprep.subr.mxu0 0.0
    %90 = vmatpush2.msra.mxu0 0.0
    %91 = vmatprep.subr.mxu0 0.0
    %92 = vmatpush2.msra.mxu0 0.0
    %93 = vmatprep.subr.mxu0 0.0
    %94 = vmatpush2.msra.mxu0 0.0
    %95 = vmatprep.subr.mxu0 0.0
    %96 = vmatpush2.msra.mxu0 0.0
    %97 = vmatprep.subr.mxu0 0.0
    %98 = vmatpush2.msra.mxu0 0.0
    %99 = vmatprep.subr.mxu0 0.0
    %100 = vmatpush2.msra.mxu0 0.0
    %101 = vmatprep.subr.mxu0 0.0
    %102 = vmatpush2.msra.mxu0 0.0
    %103 = vmatprep.subr.mxu0 0.0
    %104 = vmatpush2.msra.mxu0 0.0
    %105 = vmatprep.mubr.f32.mxu0 0.0
    %106 = vmatmul.mubr.f32.gmra.mxu0 %v36
    %v107 = vpop.f32.mrf.mxu0
    %v108 = vadd.f32 %v32, %v107
    %v109 = vpop.f32.mrf.mxu0
    %110 = vmatprep.mubr.f32.mxu0 0.0
    %111 = vmatmul.mubr.f32.gmra.mxu0 %v39
    %v112 = vpop.f32.mrf.mxu0
    %v113 = vadd.f32 %v32, %v112
    %v114 = vpop.f32.mrf.mxu0
    %115 = vdwg.mxu0
    %v116 = vmax.f32 %v108, 0.0
    %v117 = vmax.f32 %v113, 0.0
    %v118 = vld [vmem:[%s3] sm:$0xff]
    %v119 = vld [vmem:[%s3 + $0x8] sm:$0xff]
    %v120 = vld [vmem:[%s3 + $0x10] sm:$0xff]
    %v121 = vld [vmem:[%s3 + $0x18] sm:$0xff]
    %v122 = vld [vmem:[%s3 + $0x20] sm:$0xff]
    %v123 = vld [vmem:[%s3 + $0x28] sm:$0xff]
    %v124 = vld [vmem:[%s3 + $0x30] sm:$0xff]
    %v125 = vld [vmem:[%s3 + $0x38] sm:$0xff]
    %vm126 = vcmask 523264
    %v128 = vsel %vm126, %v116, 0
    %v131 = vsel %vm126, %v117, 0
    %133 = vmatprep.subr.mxu0 0.0
    %134 = vmatpush1.msra.mxu0 0.0
    %135 = vmatprep.subr.mxu0 0.0
    %136 = vmatpush1.msra.mxu0 0.0
    %137 = vmatprep.subr.mxu0 0.0
    %138 = vmatpush1.msra.mxu0 0.0
    %139 = vmatprep.subr.mxu0 0.0
    %140 = vmatpush1.msra.mxu0 0.0
    %141 = vmatprep.subr.mxu0 0.0
    %142 = vmatpush1.msra.mxu0 0.0
    %143 = vmatprep.subr.mxu0 0.0
    %144 = vmatpush1.msra.mxu0 0.0
    %145 = vmatprep.subr.mxu0 0.0
    %146 = vmatpush1.msra.mxu0 0.0
    %147 = vmatprep.subr.mxu0 0.0
    %148 = vmatpush1.msra.mxu0 0.0
    %149 = vmatprep.subr.mxu0 0.0
    %150 = vmatpush1.msra.mxu0 %v125
    %151 = vmatprep.subr.mxu0 0.0
    %152 = vmatpush1.msra.mxu0 %v124
    %153 = vmatprep.subr.mxu0 0.0
    %154 = vmatpush1.msra.mxu0 %v123
    %155 = vmatprep.subr.mxu0 0.0
    %156 = vmatpush1.msra.mxu0 %v122
    %157 = vmatprep.subr.mxu0 0.0
    %158 = vmatpush1.msra.mxu0 %v121
    %159 = vmatprep.subr.mxu0 0.0
    %160 = vmatpush1.msra.mxu0 %v120
    %161 = vmatprep.subr.mxu0 0.0
    %162 = vmatpush1.msra.mxu0 %v119
    %163 = vmatprep.subr.mxu0 0.0
    %164 = vmatpush1.msra.mxu0 %v118
    %165 = vmatprep.subr.mxu0 0.0
    %166 = vmatpush2.msra.mxu0 0.0
    %167 = vmatprep.subr.mxu0 0.0
    %168 = vmatpush2.msra.mxu0 0.0
    %169 = vmatprep.subr.mxu0 0.0
    %170 = vmatpush2.msra.mxu0 0.0
    %171 = vmatprep.subr.mxu0 0.0
    %172 = vmatpush2.msra.mxu0 0.0
    %173 = vmatprep.subr.mxu0 0.0
    %174 = vmatpush2.msra.mxu0 0.0
    %175 = vmatprep.subr.mxu0 0.0
    %176 = vmatpush2.msra.mxu0 0.0
    %177 = vmatprep.subr.mxu0 0.0
    %178 = vmatpush2.msra.mxu0 0.0
    %179 = vmatprep.subr.mxu0 0.0
    %180 = vmatpush2.msra.mxu0 0.0
    %181 = vmatprep.subr.mxu0 0.0
    %182 = vmatpush2.msra.mxu0 0.0
    %183 = vmatprep.subr.mxu0 0.0
    %184 = vmatpush2.msra.mxu0 0.0
    %185 = vmatprep.subr.mxu0 0.0
    %186 = vmatpush2.msra.mxu0 0.0
    %187 = vmatprep.subr.mxu0 0.0
    %188 = vmatpush2.msra.mxu0 0.0
    %189 = vmatprep.subr.mxu0 0.0
    %190 = vmatpush2.msra.mxu0 0.0
    %191 = vmatprep.subr.mxu0 0.0
    %192 = vmatpush2.msra.mxu0 0.0
    %193 = vmatprep.subr.mxu0 0.0
    %194 = vmatpush2.msra.mxu0 0.0
    %195 = vmatprep.subr.mxu0 0.0
    %196 = vmatpush2.msra.mxu0 0.0
    %197 = vmatprep.mubr.f32.mxu0 0.0
    %198 = vmatmul.mubr.f32.gmra.mxu0 %v128
    %v199 = vpop.f32.mrf.mxu0
    %v200 = vadd.f32 0.0, %v199
    %v201 = vpop.f32.mrf.mxu0
    %202 = vmatprep.mubr.f32.mxu0 0.0
    %203 = vmatmul.mubr.f32.gmra.mxu0 %v131
    %v204 = vpop.f32.mrf.mxu0
    %v205 = vadd.f32 0.0, %v204
    %v206 = vpop.f32.mrf.mxu0
    %207 = vdwg.mxu0
    %p208 = scmp.eq.s32.totalorder 0, 0
    // Predicated region
    $region22: #{tpu_custom_call.1} parent=1 // pred_check
      %p209 = pneg %p208
    $region23: #{tpu_custom_call.1} parent=1 // pred_check_branch
      %211 = sbr.rel (%p209) target = $region25
    $region24: #{tpu_custom_call.1} parent=1 // pred_region
      %212 = vst.msk [vmem:[#allocation2] sm:$0xff] %vm34, %v200
      %213 = vst.msk [vmem:[#allocation2 + $0x8] sm:$0xff] %vm34, %v205
    $region25: #{tpu_custom_call.1} parent=1 // pred_fallthru
      _
    %p214 = scmp.gt.s32.totalorder 0, 0
    // Predicated region
    $region26: #{tpu_custom_call.1} parent=1 // pred_check
      %p215 = pneg %p214
    $region27: #{tpu_custom_call.1} parent=1 // pred_check_branch
      %217 = sbr.rel (%p215) target = $region29
    $region28: #{tpu_custom_call.1} parent=1 // pred_region
      %v218 = vld [vmem:[#allocation2] sm:$0xff]
      %v219 = vld [vmem:[#allocation2 + $0x8] sm:$0xff]
      %v220 = vadd.f32 %v218, %v200
      %v221 = vadd.f32 %v219, %v205
      %222 = vst.msk [vmem:[#allocation2] sm:$0xff] %vm34, %v220
      %223 = vst.msk [vmem:[#allocation2 + $0x8] sm:$0xff] %vm34, %v221
    $region29: #{tpu_custom_call.1} parent=1 // pred_fallthru
      _
    // Predicated region
    $region30: #{tpu_custom_call.1} parent=1 // pred_check
      %p224 = pneg %p208
    $region31: #{tpu_custom_call.1} parent=1 // pred_check_branch
      %226 = sbr.rel (%p224) target = $region33
    $region32: #{tpu_custom_call.1} parent=1 // pred_region
      %v227 = vld [vmem:[#allocation2] sm:$0xff]
      %v228 = vld [vmem:[#allocation2 + $0x8] sm:$0xff]
      %v229 = vld [vmem:[%s4] sm:$0x1]
      %v231 = vlaneseq
      %v232 = vshrl.u32 %v231, 7
      %v233 = vsub.s32 0, %v232
      %v234 = vrot.slane %v229, %v233
      %v236 = vadd.f32 %v227, %v234
      %v237 = vadd.f32 %v228, %v234
      %238 = vst.msk [vmem:[#allocation2] sm:$0xff] %vm34, %v236
      %239 = vst.msk [vmem:[#allocation2 + $0x8] sm:$0xff] %vm34, %v237
    $region33: #{tpu_custom_call.1} parent=1 // pred_fallthru
      _
    // Predicated region
    $region34: #{tpu_custom_call.1} parent=1 // pred_check
      _
    $region35: #{tpu_custom_call.1} parent=1 // pred_check_branch
      %241 = sbr.rel (0) target = $region37
    $region36: #{tpu_custom_call.1} parent=1 // pred_region
      %s243 = ssub.s32 256, 256
      %244 = vsyncadd [#allocation3], %s243
      %s245 = sshll.u32 [#allocation2], 4
      %s246 = int_to_ptr.vmem [resolvable:$true] %s245
      %251 = dma.vmem_to_hbm [thread:$0]  %s246, 256, %s5, [#allocation3], 128, 128, 8
    $region37: #{tpu_custom_call.1} parent=1 // pred_fallthru
      _
    // Predicated region
    $region38: #{tpu_custom_call.1} parent=1 // pred_check
      _
    $region39: #{tpu_custom_call.1} parent=1 // pred_check_branch
      %253 = sbr.rel (0) target = $region41
    $region40: #{tpu_custom_call.1} parent=1 // pred_region
      %254 = dma.done [#allocation3], 256
    $region41: #{tpu_custom_call.1} parent=1 // pred_fallthru
      _
    %255 = vsyncpa [#allocation3], 1

</llo_original>
